<compile_context>
chip_gen: v7x
topology: tpu7x:2x2x1
jax: 0.10.0
libtpu: 0.0.40
codegen_flags: <defaults>
</compile_context>

<pallas_src>
import functools

import jax
import jax.numpy as jnp
from jax.experimental import pallas as pl
from jax.experimental.pallas import tpu as pltpu

COMPUTE_DTYPE = jnp.bfloat16   # MXU-native operand dtype; accumulation stays f32
OUT_PAD = 128                  # lane-dense output slab width


# ----------------------------- fused Pallas kernel -------------------------- #

def _make_fused_kernel(block_b, S, D, filter_num, kernel_list):
    Fn = filter_num
    C = sum(kernel_list) * Fn           # total packed tap columns

    def kernel(x_ref, wcat_ref, bcat_ref, fcw_ref, fcb_ref, o_ref):
        # x_ref   : (block_b*S, D)        bf16
        # wcat_ref: (D, C)                bf16  -- every tap of every branch, packed
        # bcat_ref: (1, n_branch*Fn)      f32
        # fcw_ref : (n_branch*Fn, OUT_PAD) bf16 (zero-padded past label_size)
        # fcb_ref : (1, OUT_PAD)          f32
        # o_ref   : (block_b, OUT_PAD)    f32

        # One MXU matmul computes every tap of every branch at once:
        #   p[b*S + s, off_br + j*Fn + f] = <x[b, s, :], w_br[f, 0, j, :]>
        p = jnp.dot(x_ref[...], wcat_ref[...],
                    preferred_element_type=jnp.float32)            # (block_b*S, C)
        p3 = p.reshape(block_b, S, C)

        pooled = []
        off = 0
        for k in kernel_list:
            T = S - k + 1                                          # valid positions
            a = p3[:, 0:T, off:off + Fn]                           # tap 0
            for j in range(1, k):                                  # tap shift-adds (VPU)
                a = a + p3[:, j:j + T, off + j * Fn:off + (j + 1) * Fn]
            pooled.append(jnp.max(a, axis=1))                      # MaxPool over positions
            off += k * Fn
        feat = jnp.concatenate(pooled, axis=1)                     # (block_b, n_br*Fn)
        # bias + ReLU hoisted out of the window loop.
        feat = jnp.maximum(feat + bcat_ref[...], 0.0)
        # TODO(synk): F.dropout in the reference forward defaults to training=True
        # (stochastic); implemented as identity (eval semantics) for determinism.
        logits = jnp.dot(feat.astype(fcw_ref.dtype), fcw_ref[...],
                         preferred_element_type=jnp.float32) + fcb_ref[...]
        o_ref[...] = logits.astype(o_ref.dtype)

    return kernel


def _pick_block_b(B):
    # Whole batch in one program while it trivially fits VMEM; tile (and let the
    # "parallel" grid axis shard across TensorCores / pipeline DMA) once it grows.
    if B <= 256:
        return B
    for cand in (256, 128, 64, 32, 16, 8):
        if B % cand == 0:
            return cand
    return B


def textcnn_forward(x_nchw, prepped, *, filter_num, kernel_list, label_size):
    """x_nchw: (B, 1, S, D) float32 -> logits (B, label_size) float32."""
    B, _, S, D = x_nchw.shape
    assert S >= max(kernel_list), "sentence shorter than largest conv kernel"
    n_feat = filter_num * len(kernel_list)
    C = sum(kernel_list) * filter_num
    out_pad = prepped["fc_w"].shape[1]

    # squeeze channel + flatten to a lane-dense 2-D slab, cast MXU operand once.
    x2 = x_nchw.reshape(B * S, D).astype(COMPUTE_DTYPE)

    block_b = _pick_block_b(B)
    assert B % block_b == 0
    grid = (B // block_b,)

    kernel = _make_fused_kernel(block_b, S, D, filter_num, tuple(kernel_list))
    out = pl.pallas_call(
        kernel,
        out_shape=jax.ShapeDtypeStruct((B, out_pad), jnp.float32),
        grid=grid,
        in_specs=[
            pl.BlockSpec((block_b * S, D), lambda i: (i, 0)),   # x (batch-tiled)
            pl.BlockSpec((D, C), lambda i: (0, 0)),             # packed conv taps
            pl.BlockSpec((1, n_feat), lambda i: (0, 0)),        # conv biases
            pl.BlockSpec((n_feat, out_pad), lambda i: (0, 0)),  # fc weight (padded)
            pl.BlockSpec((1, out_pad), lambda i: (0, 0)),       # fc bias (padded)
        ],
        out_specs=pl.BlockSpec((block_b, out_pad), lambda i: (i, 0)),
        compiler_params=pltpu.CompilerParams(
            dimension_semantics=("parallel",)),
    )(x2, prepped["w_cat"], prepped["b_cat"], prepped["fc_w"], prepped["fc_b"])
    return out[:, :label_size]


# ------------------------- parameter init / relayout ------------------------ #

def init_params(key, vec_dim, filter_num, label_size, kernel_list):
    """PyTorch-layout parameters: Conv2d (F,1,k,D), Linear (out,in); torch-style init."""
    params = {"convs": []}
    for i, k in enumerate(kernel_list):
        kw, kb = jax.random.split(jax.random.fold_in(key, i))
        fan_in = 1 * k * vec_dim
        bound = 1.0 / (fan_in ** 0.5)
        w = jax.random.uniform(kw, (filter_num, 1, k, vec_dim), jnp.float32, -bound, bound)
        b = jax.random.uniform(kb, (filter_num,), jnp.float32, -bound, bound)
        params["convs"].append((w, b))
    in_features = filter_num * len(kernel_list)
    kw, kb = jax.random.split(jax.random.fold_in(key, 10_000))
    bound = 1.0 / (in_features ** 0.5)
    params["fc_w"] = jax.random.uniform(kw, (label_size, in_features), jnp.float32, -bound, bound)
    params["fc_b"] = jax.random.uniform(kb, (label_size,), jnp.float32, -bound, bound)
    return params


def prepare_params(params, out_pad=OUT_PAD, compute_dtype=COMPUTE_DTYPE):
    """One-time weight relayout/cast so the per-call forward path has zero transposes."""
    taps, biases = [], []
    for (w, b) in params["convs"]:
        Fn, _, k, D = w.shape
        for j in range(k):
            taps.append(jnp.transpose(w[:, 0, j, :]))              # (D, Fn) per tap
        biases.append(b)
    w_cat = jnp.concatenate(taps, axis=1).astype(compute_dtype)    # (D, sum(k)*Fn)
    b_cat = jnp.concatenate(biases).reshape(1, -1).astype(jnp.float32)

    fc_w = jnp.transpose(params["fc_w"]).astype(jnp.float32)       # (in, out)
    in_f, out_f = fc_w.shape
    assert out_f <= out_pad
    fc_w_pad = jnp.zeros((in_f, out_pad), jnp.float32).at[:, :out_f].set(fc_w)
    fc_b_pad = jnp.zeros((1, out_pad), jnp.float32).at[:, :out_f].set(params["fc_b"])
    return {
        "w_cat": w_cat,                              # (D, C)            bf16
        "b_cat": b_cat,                              # (1, n_feat)       f32
        "fc_w": fc_w_pad.astype(compute_dtype),      # (n_feat, OUT_PAD) bf16
        "fc_b": fc_b_pad,                            # (1, OUT_PAD)      f32
    }


# ------------------------------ plain-JAX reference ------------------------- #

def reference_forward(x_nchw, params, compute_dtype=COMPUTE_DTYPE):
    """Reference emulating the kernel's bf16-operand / f32-accumulate numerics."""
    def c(a):  # bf16 rounding applied to MXU operands in the kernel
        return a.astype(compute_dtype).astype(jnp.float32)

    x = jnp.squeeze(x_nchw, 1)
    B, S, D = x.shape
    xc = c(x)
    pooled = []
    for (w, b) in params["convs"]:
        Fn, _, k, _ = w.shape
        wf = c(w.reshape(Fn, k * D))
        outs = []
        for t in range(S - k + 1):
            window = xc[:, t:t + k, :].reshape(B, k * D)
            outs.append(window @ wf.T + b)
        conv = jnp.maximum(jnp.stack(outs, axis=-1), 0.0)          # ReLU
        pooled.append(jnp.max(conv, axis=-1))                      # MaxPool
    out = jnp.concatenate(pooled, axis=1)
    return c(out) @ c(jnp.transpose(params["fc_w"])) + params["fc_b"]


# --------------------------------- main -------------------------------------- #

if __name__ == "__main__":
    vec_dim = 32
    filter_num = 8
    sentence_max_size = 16
    label_size = 4
    kernel_list = [2, 3, 4]
    batch = 2

    key = jax.random.PRNGKey(0)
    pkey, xkey = jax.random.split(key)
    params = init_params(pkey, vec_dim, filter_num, label_size, kernel_list)
    prepped = prepare_params(params)
    x = jax.random.normal(xkey, (batch, 1, sentence_max_size, vec_dim), jnp.float32)

    fwd = jax.jit(functools.partial(
        textcnn_forward, filter_num=filter_num,
        kernel_list=tuple(kernel_list), label_size=label_size))
    out = jax.block_until_ready(fwd(x, prepped))

    ref = reference_forward(x, params)
    assert out.shape == (batch, label_size), out.shape
    assert jnp.allclose(out, ref, atol=1e-3, rtol=1e-3), (out, ref)

    print("KERNEL_OK")
</pallas_src>

<mosaic_0001>
module attributes {stable_mosaic.version = 11 : i64} {
  func.func @kernel(%arg0: i32, %arg1: memref<32x32xbf16, #tpu.memory_space<vmem>>, %arg2: memref<32x72xbf16, #tpu.memory_space<vmem>>, %arg3: memref<1x24xf32, #tpu.memory_space<vmem>>, %arg4: memref<24x128xbf16, #tpu.memory_space<vmem>>, %arg5: memref<1x128xf32, #tpu.memory_space<vmem>>, %arg6: memref<2x128xf32, #tpu.memory_space<vmem>>) attributes {dimension_semantics = [#tpu.dimension_semantics<parallel>], iteration_bounds = array<i64: 1>, scalar_prefetch = 0 : i64, scratch_operands = 0 : i64, tpu.core_type = #tpu.core_type<tc>, window_params = [{transform_indices = @transform_0, window_bounds = array<i64: 32, 32>}, {pipeline_mode = #tpu.pipeline_mode<synchronous>, transform_indices = @transform_1, window_bounds = array<i64: 32, 72>}, {pipeline_mode = #tpu.pipeline_mode<synchronous>, transform_indices = @transform_2, window_bounds = array<i64: 1, 24>}, {pipeline_mode = #tpu.pipeline_mode<synchronous>, transform_indices = @transform_3, window_bounds = array<i64: 24, 128>}, {pipeline_mode = #tpu.pipeline_mode<synchronous>, transform_indices = @transform_4, window_bounds = array<i64: 1, 128>}, {transform_indices = @transform_5, window_bounds = array<i64: 2, 128>}]} {
    %c0 = arith.constant 0 : index
    %c0_0 = arith.constant 0 : index
    %0 = vector.load %arg1[%c0, %c0_0] : memref<32x32xbf16, #tpu.memory_space<vmem>>, vector<32x32xbf16>
    %c0_1 = arith.constant 0 : index
    %c0_2 = arith.constant 0 : index
    %1 = vector.load %arg2[%c0_1, %c0_2] : memref<32x72xbf16, #tpu.memory_space<vmem>>, vector<32x72xbf16>
    %cst = arith.constant dense<0.000000e+00> : vector<32x72xf32>
    %2 = tpu.matmul %0, %1, %cst {dimension_numbers = #tpu.dot_dimension_numbers<[1], [0], [0], [1], [0, 0, 1, 1], [], []>} : vector<32x32xbf16>, vector<32x72xbf16>, vector<32x72xf32> -> vector<32x72xf32>
    %3 = vector.shape_cast %2 : vector<32x72xf32> to vector<2x16x72xf32>
    %4 = vector.extract_strided_slice %3 {offsets = [0, 0, 0], sizes = [2, 15, 8], strides = [1, 1, 1]} : vector<2x16x72xf32> to vector<2x15x8xf32>
    %5 = vector.extract_strided_slice %3 {offsets = [0, 1, 8], sizes = [2, 15, 8], strides = [1, 1, 1]} : vector<2x16x72xf32> to vector<2x15x8xf32>
    %6 = arith.addf %4, %5 : vector<2x15x8xf32>
    %cst_3 = arith.constant dense<0xFF800000> : vector<2x8xf32>
    %7 = vector.multi_reduction <maximumf>, %6, %cst_3 [1] : vector<2x15x8xf32> to vector<2x8xf32>
    %8 = vector.extract_strided_slice %3 {offsets = [0, 0, 16], sizes = [2, 14, 8], strides = [1, 1, 1]} : vector<2x16x72xf32> to vector<2x14x8xf32>
    %9 = vector.extract_strided_slice %3 {offsets = [0, 1, 24], sizes = [2, 14, 8], strides = [1, 1, 1]} : vector<2x16x72xf32> to vector<2x14x8xf32>
    %10 = arith.addf %8, %9 : vector<2x14x8xf32>
    %11 = vector.extract_strided_slice %3 {offsets = [0, 2, 32], sizes = [2, 14, 8], strides = [1, 1, 1]} : vector<2x16x72xf32> to vector<2x14x8xf32>
    %12 = arith.addf %10, %11 : vector<2x14x8xf32>
    %cst_4 = arith.constant dense<0xFF800000> : vector<2x8xf32>
    %13 = vector.multi_reduction <maximumf>, %12, %cst_4 [1] : vector<2x14x8xf32> to vector<2x8xf32>
    %14 = vector.extract_strided_slice %3 {offsets = [0, 0, 40], sizes = [2, 13, 8], strides = [1, 1, 1]} : vector<2x16x72xf32> to vector<2x13x8xf32>
    %15 = vector.extract_strided_slice %3 {offsets = [0, 1, 48], sizes = [2, 13, 8], strides = [1, 1, 1]} : vector<2x16x72xf32> to vector<2x13x8xf32>
    %16 = arith.addf %14, %15 : vector<2x13x8xf32>
    %17 = vector.extract_strided_slice %3 {offsets = [0, 2, 56], sizes = [2, 13, 8], strides = [1, 1, 1]} : vector<2x16x72xf32> to vector<2x13x8xf32>
    %18 = arith.addf %16, %17 : vector<2x13x8xf32>
    %19 = vector.extract_strided_slice %3 {offsets = [0, 3, 64], sizes = [2, 13, 8], strides = [1, 1, 1]} : vector<2x16x72xf32> to vector<2x13x8xf32>
    %20 = arith.addf %18, %19 : vector<2x13x8xf32>
    %cst_5 = arith.constant dense<0xFF800000> : vector<2x8xf32>
    %21 = vector.multi_reduction <maximumf>, %20, %cst_5 [1] : vector<2x13x8xf32> to vector<2x8xf32>
    %22 = tpu.concatenate %7, %13, %21 in 1 : vector<2x8xf32>, vector<2x8xf32>, vector<2x8xf32> -> vector<2x24xf32>
    %c0_6 = arith.constant 0 : index
    %c0_7 = arith.constant 0 : index
    %23 = vector.load %arg3[%c0_6, %c0_7] : memref<1x24xf32, #tpu.memory_space<vmem>>, vector<1x24xf32>
    %24 = vector.broadcast %23 : vector<1x24xf32> to vector<2x24xf32>
    %25 = arith.addf %22, %24 : vector<2x24xf32>
    %cst_8 = arith.constant 0.000000e+00 : f32
    %26 = vector.broadcast %cst_8 : f32 to vector<2x24xf32>
    %27 = arith.maximumf %25, %26 : vector<2x24xf32>
    %28 = arith.truncf %27 : vector<2x24xf32> to vector<2x24xbf16>
    %c0_9 = arith.constant 0 : index
    %c0_10 = arith.constant 0 : index
    %29 = vector.load %arg4[%c0_9, %c0_10] : memref<24x128xbf16, #tpu.memory_space<vmem>>, vector<24x128xbf16>
    %cst_11 = arith.constant dense<0.000000e+00> : vector<2x128xf32>
    %30 = tpu.matmul %28, %29, %cst_11 {dimension_numbers = #tpu.dot_dimension_numbers<[1], [0], [0], [1], [0, 0, 1, 1], [], []>} : vector<2x24xbf16>, vector<24x128xbf16>, vector<2x128xf32> -> vector<2x128xf32>
    %c0_12 = arith.constant 0 : index
    %c0_13 = arith.constant 0 : index
    %31 = vector.load %arg5[%c0_12, %c0_13] : memref<1x128xf32, #tpu.memory_space<vmem>>, vector<1x128xf32>
    %32 = vector.broadcast %31 : vector<1x128xf32> to vector<2x128xf32>
    %33 = arith.addf %30, %32 : vector<2x128xf32>
    %c0_14 = arith.constant 0 : index
    %c0_15 = arith.constant 0 : index
    %34 = vector.load %arg6[%c0_14, %c0_15] : memref<2x128xf32, #tpu.memory_space<vmem>>, vector<2x128xf32>
    tpu.vector_store %arg6[%c0_14, %c0_15], %33 {strides = array<i32>} : memref<2x128xf32, #tpu.memory_space<vmem>>, vector<2x128xf32>,
    return
  }
  func.func @transform_0(%arg0: i32) -> (i32, i32) {
    %c0_i32 = arith.constant 0 : i32
    %c0_i32_0 = arith.constant 0 : i32
    return %arg0, %c0_i32 : i32, i32
  }
  func.func @transform_1(%arg0: i32) -> (i32, i32) {
    %c0_i32 = arith.constant 0 : i32
    %c0_i32_0 = arith.constant 0 : i32
    %c0_i32_1 = arith.constant 0 : i32
    return %c0_i32, %c0_i32_0 : i32, i32
  }
  func.func @transform_2(%arg0: i32) -> (i32, i32) {
    %c0_i32 = arith.constant 0 : i32
    %c0_i32_0 = arith.constant 0 : i32
    %c0_i32_1 = arith.constant 0 : i32
    return %c0_i32, %c0_i32_0 : i32, i32
  }
  func.func @transform_3(%arg0: i32) -> (i32, i32) {
    %c0_i32 = arith.constant 0 : i32
    %c0_i32_0 = arith.constant 0 : i32
    %c0_i32_1 = arith.constant 0 : i32
    return %c0_i32, %c0_i32_0 : i32, i32
  }
  func.func @transform_4(%arg0: i32) -> (i32, i32) {
    %c0_i32 = arith.constant 0 : i32
    %c0_i32_0 = arith.constant 0 : i32
    %c0_i32_1 = arith.constant 0 : i32
    return %c0_i32, %c0_i32_0 : i32, i32
  }
  func.func @transform_5(%arg0: i32) -> (i32, i32) {
    %c0_i32 = arith.constant 0 : i32
    %c0_i32_0 = arith.constant 0 : i32
    return %arg0, %c0_i32 : i32, i32
  }
}

</mosaic_0001>

<llo_original>
// kernel: textcnn_forward.1
$region0: #{textcnn_forward.1}
  #allocation0 [shape = 'u32[]', space=smem, size = 0x4, offset = 0x4, fixed_abs, tag = 'smem constant byte address 0x4 - core index']
  #allocation1 [shape = 'u32[144,128]{1,0:T(1,128)}', space=vmem, size = 0x12000, scoped, tag = 'internal scratch']
  %s0 = inlined_call_operand.vmem [shape: bf16[32,32], index: 0, kind: input, shape index: {}]
  %s1 = inlined_call_operand.vmem [shape: bf16[32,72], index: 1, kind: input, shape index: {}]
  %s2 = inlined_call_operand.vmem [shape: f32[1,24], index: 2, kind: input, shape index: {}]
  %s3 = inlined_call_operand.vmem [shape: bf16[24,128], index: 3, kind: input, shape index: {}]
  %s4 = inlined_call_operand.vmem [shape: f32[1,128], index: 4, kind: input, shape index: {}]
  %s5 = inlined_call_operand.hbm [shape: f32[2,128], index: 5, kind: output, shape index: {}]
  %s6 = sld [smem:[#allocation0]]
  $region30: #{textcnn_forward.1} parent=0
    _
  %s8 = ssub.s32 1, %s6
  %s9 = scalar_select 0, %s8, %s6
  $region1: #{textcnn_forward.1} parent=0
    #allocation2 [shape = 'u8[1024]{0}', space=vmem, size = 0x400, scoped, tag = 'output window, operand 0, single buffered']
    #allocation3 [shape = 's32[1]{0}', space=sflag, size = 0x4, scoped, tag = 'scoped memory for textcnn_forward.1']
    %10 = vsyncpa [#allocation3], 0
    // Predicated region
    $region2: #{textcnn_forward.1} parent=1 // pred_check
      _
    $region3: #{textcnn_forward.1} parent=1 // pred_check_branch
      %12 = sbr.rel (0) target = $region5
    $region4: #{textcnn_forward.1} parent=1 // pred_region
      _
    $region5: #{textcnn_forward.1} parent=1 // pred_fallthru
      _
    // Predicated region
    $region6: #{textcnn_forward.1} parent=1 // pred_check
      _
    $region7: #{textcnn_forward.1} parent=1 // pred_check_branch
      %14 = sbr.rel (0) target = $region9
    $region8: #{textcnn_forward.1} parent=1 // pred_region
      _
    $region9: #{textcnn_forward.1} parent=1 // pred_fallthru
      _
    // Predicated region
    $region10: #{textcnn_forward.1} parent=1 // pred_check
      _
    $region11: #{textcnn_forward.1} parent=1 // pred_check_branch
      %16 = sbr.rel (0) target = $region13
    $region12: #{textcnn_forward.1} parent=1 // pred_region
      _
    $region13: #{textcnn_forward.1} parent=1 // pred_fallthru
      _
    // Predicated region
    $region14: #{textcnn_forward.1} parent=1 // pred_check
      _
    $region15: #{textcnn_forward.1} parent=1 // pred_check_branch
      %18 = sbr.rel (0) target = $region17
    $region16: #{textcnn_forward.1} parent=1 // pred_region
      _
    $region17: #{textcnn_forward.1} parent=1 // pred_fallthru
      _
    // Predicated region
    $region18: #{textcnn_forward.1} parent=1 // pred_check
      _
    $region19: #{textcnn_forward.1} parent=1 // pred_check_branch
      %20 = sbr.rel (0) target = $region21
    $region20: #{textcnn_forward.1} parent=1 // pred_region
      _
    $region21: #{textcnn_forward.1} parent=1 // pred_fallthru
      _
    %v22 = vld [vmem:[%s0] sm:$0xf]
    %v23 = vld [vmem:[%s0 + $0x4] sm:$0xf]
    %v24 = vld [vmem:[%s0 + $0x8] sm:$0xf]
    %v25 = vld [vmem:[%s0 + $0xc] sm:$0xf]
    %v26 = vld [vmem:[%s1] sm:$0xf]
    %v27 = vld [vmem:[%s1 + $0x4] sm:$0xf]
    %v28 = vld [vmem:[%s1 + $0x8] sm:$0xf]
    %v29 = vld [vmem:[%s1 + $0xc] sm:$0xf]
    %v34 = vunpack.c.l.b16 %v22
    %v35 = vunpack.c.l.b16 %v23
    %v36 = vunpack.c.l.b16 %v24
    %v37 = vunpack.c.l.b16 %v25
    %v38 = vpack.c.b16 %v35, %v34
    %v39 = vpack.c.b16 %v37, %v36
    %v44 = vunpack.c.l.b16 %v26
    %v45 = vunpack.c.l.b16 %v27
    %v46 = vunpack.c.l.b16 %v28
    %v47 = vunpack.c.l.b16 %v29
    %v48 = vpack.c.b16 %v45, %v44
    %v49 = vpack.c.b16 %v47, %v46
    %vm52 = vcmask 261120
    %v54 = vsel %vm52, %v38, 0
    %v57 = vsel %vm52, %v39, 0
    %59 = vmatprep.subr.bf16.mxu0 0
    %60 = vmatpush1.bf16.msra.mxu0 %v48
    %61 = vmatprep.subr.bf16.mxu0 0
    %62 = vmatpush1.bf16.msra.mxu0 %v49
    %63 = vmatprep.subr.bf16.mxu0 0
    %64 = vmatpush1.bf16.msra.mxu0 0
    %65 = vmatprep.subr.bf16.mxu0 0
    %66 = vmatpush1.bf16.msra.mxu0 0
    %67 = vmatprep.subr.bf16.mxu0 0
    %68 = vmatpush1.bf16.msra.mxu0 0
    %69 = vmatprep.subr.bf16.mxu0 0
    %70 = vmatpush1.bf16.msra.mxu0 0
    %71 = vmatprep.subr.bf16.mxu0 0
    %72 = vmatpush1.bf16.msra.mxu0 0
    %73 = vmatprep.subr.bf16.mxu0 0
    %74 = vmatpush1.bf16.msra.mxu0 0
    %75 = vmatprep.subr.bf16.mxu0 0
    %76 = vmatpush1.bf16.msra.mxu0 0
    %77 = vmatprep.subr.bf16.mxu0 0
    %78 = vmatpush1.bf16.msra.mxu0 0
    %79 = vmatprep.subr.bf16.mxu0 0
    %80 = vmatpush1.bf16.msra.mxu0 0
    %81 = vmatprep.subr.bf16.mxu0 0
    %82 = vmatpush1.bf16.msra.mxu0 0
    %83 = vmatprep.subr.bf16.mxu0 0
    %84 = vmatpush1.bf16.msra.mxu0 0
    %85 = vmatprep.subr.bf16.mxu0 0
    %86 = vmatpush1.bf16.msra.mxu0 0
    %87 = vmatprep.subr.bf16.mxu0 0
    %88 = vmatpush1.bf16.msra.mxu0 0
    %89 = vmatprep.subr.bf16.mxu0 0
    %90 = vmatpush1.bf16.msra.mxu0 0
    %91 = vmatprep.mubr.bf16.mxu0 0
    %92 = vmatmul.mubr.bf16.gmra.mrb[0].mxu0 %v54
    %v93 = vpop.f32.mrb[0].mxu0
    %v94 = vadd.f32 0.0, %v93
    %v95 = vpop.f32.mrb[0].mxu0
    %v96 = vpop.f32.mrb[0].mxu0
    %v97 = vadd.f32 0.0, %v96
    %v98 = vpop.f32.mrb[0].mxu0
    %99 = vmatprep.mubr.bf16.mxu0 0
    %100 = vmatmul.mubr.bf16.gmra.mrb[0].mxu0 %v57
    %v101 = vpop.f32.mrb[0].mxu0
    %v102 = vadd.f32 0.0, %v101
    %v103 = vpop.f32.mrb[0].mxu0
    %v104 = vpop.f32.mrb[0].mxu0
    %v105 = vadd.f32 0.0, %v104
    %v106 = vpop.f32.mrb[0].mxu0
    %107 = vdwg.mxu0
    %vm112 = vcmask 1046528
    %v113 = vrot.slane %v94, 1
    %v114 = vrot.slane %v97, 1
    %v115 = vsel %vm112, %v113, %v114
    %v116 = vrot.slane %v102, 1
    %v117 = vrot.slane %v105, 1
    %v118 = vsel %vm112, %v116, %v117
    %119 = vrot.lane.b32.xlu0 %v115, 120
    %v120 = vpop.permute.xlu0 %119
    %121 = vrot.lane.b32.xlu0 %v114, 120
    %v122 = vpop.permute.xlu0 %121
    %123 = vrot.lane.b32.xlu0 %v118, 120
    %v124 = vpop.permute.xlu0 %123
    %125 = vrot.lane.b32.xlu0 %v117, 120
    %v126 = vpop.permute.xlu0 %125
    %v131 = vadd.f32 %v94, %v120
    %v132 = vadd.f32 %v97, %v122
    %v133 = vadd.f32 %v102, %v124
    %v134 = vadd.f32 %v105, %v126
    %vm135 = vcmask 64512
    %v136 = vsel %vm135, %v131, -inf
    %vm137 = vcmask 63488
    %v138 = vsel %vm137, %v132, -inf
    %v139 = vmax.f32 %v136, %v138
    %v140 = vrot.slane %v139, 4
    %v141 = vmax.f32 %v139, %v140
    %v142 = vrot.slane %v141, 2
    %v143 = vmax.f32 %v141, %v142
    %v144 = vrot.slane %v143, 1
    %v145 = vmax.f32 %v143, %v144
    %v146 = vsel %vm135, %v133, -inf
    %v147 = vsel %vm137, %v134, -inf
    %v148 = vmax.f32 %v146, %v147
    %v149 = vrot.slane %v148, 4
    %v150 = vmax.f32 %v148, %v149
    %v151 = vrot.slane %v150, 2
    %v152 = vmax.f32 %v150, %v151
    %v153 = vrot.slane %v152, 1
    %v154 = vmax.f32 %v152, %v153
    %vm155 = vcmask 1045504
    %v156 = vrot.slane %v94, 2
    %v157 = vrot.slane %v97, 2
    %v158 = vsel %vm155, %v156, %v157
    %v159 = vrot.slane %v102, 2
    %v160 = vrot.slane %v105, 2
    %v161 = vsel %vm155, %v159, %v160
    %162 = vrot.lane.b32.xlu0 %v158, 112
    %v163 = vpop.permute.xlu0 %162
    %164 = vrot.lane.b32.xlu0 %v157, 112
    %v165 = vpop.permute.xlu0 %164
    %166 = vrot.lane.b32.xlu0 %v161, 112
    %v167 = vpop.permute.xlu0 %166
    %168 = vrot.lane.b32.xlu0 %v160, 112
    %v169 = vpop.permute.xlu0 %168
    %v174 = vadd.f32 %v131, %v163
    %v175 = vadd.f32 %v132, %v165
    %v176 = vadd.f32 %v133, %v167
    %v177 = vadd.f32 %v134, %v169
    %vm178 = vcmask 195712
    %v179 = vsel %vm178, %v174, -inf
    %vm180 = vcmask 193664
    %v181 = vsel %vm180, %v175, -inf
    %v182 = vmax.f32 %v179, %v181
    %v183 = vrot.slane %v182, 4
    %v184 = vmax.f32 %v182, %v183
    %v185 = vrot.slane %v184, 2
    %v186 = vmax.f32 %v184, %v185
    %v187 = vrot.slane %v186, 1
    %v188 = vmax.f32 %v186, %v187
    %v189 = vsel %vm178, %v176, -inf
    %v190 = vsel %vm180, %v177, -inf
    %v191 = vmax.f32 %v189, %v190
    %v192 = vrot.slane %v191, 4
    %v193 = vmax.f32 %v191, %v192
    %v194 = vrot.slane %v193, 2
    %v195 = vmax.f32 %v193, %v194
    %v196 = vrot.slane %v195, 1
    %v197 = vmax.f32 %v195, %v196
    %vm198 = vcmask 1044480
    %v199 = vrot.slane %v94, 3
    %v200 = vrot.slane %v97, 3
    %v201 = vsel %vm198, %v199, %v200
    %v202 = vrot.slane %v102, 3
    %v203 = vrot.slane %v105, 3
    %v204 = vsel %vm198, %v202, %v203
    %205 = vrot.lane.b32.xlu0 %v201, 104
    %v206 = vpop.permute.xlu0 %205
    %207 = vrot.lane.b32.xlu0 %v200, 104
    %v208 = vpop.permute.xlu0 %207
    %209 = vrot.lane.b32.xlu0 %v204, 104
    %v210 = vpop.permute.xlu0 %209
    %211 = vrot.lane.b32.xlu0 %v203, 104
    %v212 = vpop.permute.xlu0 %211
    %v217 = vadd.f32 %v174, %v206
    %v218 = vadd.f32 %v175, %v208
    %v219 = vadd.f32 %v176, %v210
    %v220 = vadd.f32 %v177, %v212
    %vm221 = vcmask 392512
    %v222 = vsel %vm221, %v217, -inf
    %vm223 = vcmask 389440
    %v224 = vsel %vm223, %v218, -inf
    %v225 = vmax.f32 %v222, %v224
    %v226 = vrot.slane %v225, 4
    %v227 = vmax.f32 %v225, %v226
    %v228 = vrot.slane %v227, 2
    %v229 = vmax.f32 %v227, %v228
    %v230 = vrot.slane %v229, 1
    %v231 = vmax.f32 %v229, %v230
    %v232 = vsel %vm221, %v219, -inf
    %v233 = vsel %vm223, %v220, -inf
    %v234 = vmax.f32 %v232, %v233
    %v235 = vrot.slane %v234, 4
    %v236 = vmax.f32 %v234, %v235
    %v237 = vrot.slane %v236, 2
    %v238 = vmax.f32 %v236, %v237
    %v239 = vrot.slane %v238, 1
    %v240 = vmax.f32 %v238, %v239
    %vm243 = vcmask 1041409
    %v244 = vsel %vm243, %v154, %v145
    %v248 = vsel %vm243, %v197, %v188
    %249 = vrot.lane.b32.xlu0 %v248, 120
    %v250 = vpop.permute.xlu0 %249
    %v254 = vsel %vm243, %v240, %v231
    %255 = vrot.lane.b32.xlu0 %v254, 104
    %v256 = vpop.permute.xlu0 %255
    %v258 = vsel %vm135, %v244, %v250
    %vm259 = vcmask 130048
    %v260 = vsel %vm259, %v258, %v256
    %v261 = vld [vmem:[%s2] sm:$0x1]
    %v263 = vlaneseq
    %v264 = vshrl.u32 %v263, 7
    %v265 = vsub.s32 0, %v264
    %v266 = vrot.slane %v261, %v265
    %v268 = vadd.f32 %v260, %v266
    %v269 = vmax.f32 %v268, 0.0
    %v270 = vpack.c.bf16 %v269, %v269
    %v271 = vld [vmem:[%s3] sm:$0xf]
    %v272 = vld [vmem:[%s3 + $0x4] sm:$0xf]
    %v273 = vld [vmem:[%s3 + $0x8] sm:$0xf]
    %v274 = vld [vmem:[%s4] sm:$0x1]
    %v276 = vlaneseq
    %v277 = vshrl.u32 %v276, 7
    %v278 = vsub.s32 0, %v277
    %v279 = vrot.slane %v274, %v278
    %v284 = vunpack.c.l.b16 %v271
    %v285 = vunpack.c.l.b16 %v272
    %v286 = vunpack.c.l.b16 %v273
    %v287 = vpack.c.b16 %v285, %v284
    %v288 = vpack.c.b16 %v286, %v286
    %vm290 = vcmask 195584
    %v292 = vsel %vm290, %v270, 0
    %vm294 = vcmask 1043456
    %v296 = vsel %vm294, %v288, 0
    %298 = vmatprep.subr.bf16.mxu0 0
    %299 = vmatpush1.bf16.msra.mxu0 %v287
    %300 = vmatprep.subr.bf16.mxu0 0
    %301 = vmatpush1.bf16.msra.mxu0 %v296
    %302 = vmatprep.subr.bf16.mxu0 0
    %303 = vmatpush1.bf16.msra.mxu0 0
    %304 = vmatprep.subr.bf16.mxu0 0
    %305 = vmatpush1.bf16.msra.mxu0 0
    %306 = vmatprep.subr.bf16.mxu0 0
    %307 = vmatpush1.bf16.msra.mxu0 0
    %308 = vmatprep.subr.bf16.mxu0 0
    %309 = vmatpush1.bf16.msra.mxu0 0
    %310 = vmatprep.subr.bf16.mxu0 0
    %311 = vmatpush1.bf16.msra.mxu0 0
    %312 = vmatprep.subr.bf16.mxu0 0
    %313 = vmatpush1.bf16.msra.mxu0 0
    %314 = vmatprep.subr.bf16.mxu0 0
    %315 = vmatpush1.bf16.msra.mxu0 0
    %316 = vmatprep.subr.bf16.mxu0 0
    %317 = vmatpush1.bf16.msra.mxu0 0
    %318 = vmatprep.subr.bf16.mxu0 0
    %319 = vmatpush1.bf16.msra.mxu0 0
    %320 = vmatprep.subr.bf16.mxu0 0
    %321 = vmatpush1.bf16.msra.mxu0 0
    %322 = vmatprep.subr.bf16.mxu0 0
    %323 = vmatpush1.bf16.msra.mxu0 0
    %324 = vmatprep.subr.bf16.mxu0 0
    %325 = vmatpush1.bf16.msra.mxu0 0
    %326 = vmatprep.subr.bf16.mxu0 0
    %327 = vmatpush1.bf16.msra.mxu0 0
    %328 = vmatprep.subr.bf16.mxu0 0
    %329 = vmatpush1.bf16.msra.mxu0 0
    %330 = vmatprep.mubr.bf16.mxu0 0
    %331 = vmatmul.mubr.bf16.gmra.mrb[0].mxu0 %v292
    %v332 = vpop.f32.mrb[0].mxu0
    %v333 = vadd.f32 %v279, %v332
    %v334 = vpop.f32.mrb[0].mxu0
    %v335 = vpop.f32.mrb[0].mxu0
    %v336 = vpop.f32.mrb[0].mxu0
    %337 = vdwg.mxu0
    %338 = vst [vmem:[#allocation2] sm:$0x3] %v333
    // Predicated region
    $region22: #{textcnn_forward.1} parent=1 // pred_check
      _
    $region23: #{textcnn_forward.1} parent=1 // pred_check_branch
      %340 = sbr.rel (0) target = $region25
    $region24: #{textcnn_forward.1} parent=1 // pred_region
      %s342 = ssub.s32 32, 32
      %343 = vsyncadd [#allocation3], %s342
      %s345 = sshll.u32 [#allocation2], 4
      %s346 = int_to_ptr.vmem [resolvable:$true] %s345
      %348 = dma.vmem_to_hbm [thread:$0]  %s346, 32, %s5, [#allocation3]
    $region25: #{textcnn_forward.1} parent=1 // pred_fallthru
      _
    // Predicated region
    $region26: #{textcnn_forward.1} parent=1 // pred_check
      _
    $region27: #{textcnn_forward.1} parent=1 // pred_check_branch
      %350 = sbr.rel (0) target = $region29
    $region28: #{textcnn_forward.1} parent=1 // pred_region
      %351 = dma.done [#allocation3], 32
    $region29: #{textcnn_forward.1} parent=1 // pred_fallthru
      _
    %352 = vsyncpa [#allocation3], 1

</llo_original>
